<compile_context>
chip_gen: v7x
topology: tpu7x:2x2x1
jax: 0.10.0
libtpu: 0.0.40
codegen_flags: <defaults>
</compile_context>

<pallas_src>
import functools

import jax
import jax.numpy as jnp
from jax.experimental import pallas as pl
from jax.experimental.pallas import tpu as pltpu


def _cdiv(a, b):
    return (a + b - 1) // b


def _tpu_config():
    """(num_cores, block_bytes, is_v7x) derived from the local device kind."""
    kind = ""
    try:
        kind = jax.devices()[0].device_kind.lower()
    except Exception:  # pragma: no cover - defensive only
        pass
    if "v7" in kind:
        # 2 TensorCores per chip, 64 MiB physical VMEM per TC.
        return 2, 3 * 1024 * 1024, True
    # v5e / v6e (and fallback): 1 TensorCore, 128 MiB VMEM.
    return 1, 6 * 1024 * 1024, False


def _choose_tile_p(c, p, itemsize, block_bytes):
    """Lane-dense pixel tile: ~block_bytes of logits, multiple of 128 lanes."""
    tile = block_bytes // max(1, c * itemsize)
    tile = max(128, min(tile, 256 * 1024))
    tile = (tile // 128) * 128
    p_ceil = _cdiv(p, 128) * 128
    return max(128, min(tile, p_ceil))


def _vmem_limit_bytes(c, tile_p, itemsize, is_v7x):
    logits_block = c * tile_p * itemsize          # one logits block
    tgt_block = 4 * tile_p                        # one int32 target block
    temps = 6 * c * tile_p * 4                    # f32 upcast + fused temporaries
    scratch = 2 * tile_p * 4                      # per-lane accumulators
    outs = 4 * tile_p * 4                         # per-lane sum/count outputs (x2 buf)
    est = 2 * logits_block + 2 * tgt_block + temps + scratch + outs + (2 << 20)
    cap = (56 << 20) if is_v7x else (100 << 20)
    return int(min(max(est, 32 << 20), cap))


def _ce2d_kernel(logits_ref, target_ref, sum_ref, cnt_ref, acc_sum, acc_cnt,
                 *, thr_t, ignore_label, tiles_per_core, tile_p, num_pix):
    core = pl.program_id(0)     # core-split axis (CORE_PARALLEL on v7x)
    n_idx = pl.program_id(1)    # batch image
    p_idx = pl.program_id(2)    # pixel tile within this core's range

    is_first = jnp.logical_and(n_idx == 0, p_idx == 0)
    is_last = jnp.logical_and(n_idx == pl.num_programs(1) - 1,
                              p_idx == pl.num_programs(2) - 1)

    @pl.when(is_first)
    def _():
        acc_sum[...] = jnp.zeros_like(acc_sum)
        acc_cnt[...] = jnp.zeros_like(acc_cnt)
        sum_ref[...] = jnp.zeros_like(sum_ref)
        cnt_ref[...] = jnp.zeros_like(cnt_ref)

    x = logits_ref[0].astype(jnp.float32)      # (C, TILE_P): channels on sublanes
    tgt = target_ref[0]                        # (1, TILE_P) int32

    # Mask lanes past the true pixel count (trailing partial / clamped duplicate
    # tile); their (garbage) logits never reach the accumulators.
    tile_id = core * tiles_per_core + p_idx
    lane = jax.lax.broadcasted_iota(jnp.int32, (1, tile_p), 1)
    in_bounds = tile_id * tile_p + lane < num_pix
    valid = jnp.logical_and(jnp.logical_and(tgt >= 0, tgt != ignore_label),
                            in_bounds)                                # (1, TILE_P)

    # One fused pass over the block after the max: xm is reused for both the
    # exp-sum and the one-hot picked sum (ce = lse - picked == log(sumexp) - picked_xm).
    m = jnp.max(x, axis=0, keepdims=True)                             # (1, TILE_P)
    xm = x - m                                                        # (C, TILE_P)
    ch = jax.lax.broadcasted_iota(jnp.int32, (x.shape[0], 1), 0)      # (C, 1) sublane iota
    onehot = ch == jnp.where(valid, tgt, 0)                           # (C, TILE_P) bool
    sumexp = jnp.sum(jnp.exp(xm), axis=0, keepdims=True)              # (1, TILE_P)
    picked = jnp.sum(jnp.where(onehot, xm, 0.0), axis=0, keepdims=True)
    ce = jnp.log(sumexp) - picked                                     # (1, TILE_P)
    keep = jnp.logical_and(ce <= thr_t, valid)

    # Lane-resident vector accumulators; counts stay exact in int32.
    acc_sum[...] += jnp.where(keep, ce, 0.0)
    acc_cnt[...] += valid.astype(jnp.int32)

    @pl.when(is_last)
    def _():
        sum_ref[...] = acc_sum[...].reshape(sum_ref.shape)
        cnt_ref[...] = acc_cnt[...].reshape(cnt_ref.shape)


def cross_entropy_2d_pnd(predict, target, thr_t=1.0, ignore_label=255,
                         num_cores=None, block_bytes=None,
                         logits_feed_dtype=None):
    """predict: (N, C, H, W) float; target: (N, H, W) int. Returns scalar f32 loss."""
    n, c, h, w = predict.shape
    assert target.shape == (n, h, w)
    p = h * w

    auto_cores, auto_block, is_v7x = _tpu_config()
    if num_cores is None:
        num_cores = auto_cores
    if block_bytes is None:
        block_bytes = auto_block

    # Free reshapes only: no NCHW->NHWC transpose, no pad, no dtype upcast in HBM.
    logits = predict.reshape(n, c, p)                 # (N, C, P)
    if logits_feed_dtype is not None:
        # e.g. bf16 to halve HBM traffic on v5e/v6e; in-kernel math stays f32.
        logits = logits.astype(logits_feed_dtype)
    tgt = target.reshape(n, 1, p).astype(jnp.int32)   # (N, 1, P)

    itemsize = jnp.dtype(logits.dtype).itemsize
    tile_p = _choose_tile_p(c, p, itemsize, block_bytes)
    num_tiles = _cdiv(p, tile_p)
    num_cores = max(1, min(int(num_cores), num_tiles))   # never split a single tile
    tiles_per_core = _cdiv(num_tiles, num_cores)
    grid = (num_cores, n, tiles_per_core)

    # Dimension semantics: genuinely shard the core axis only on v7x; on 1-TC
    # chips everything is a plain serial loop (no duplicate-tile waste since
    # num_cores collapses to 1 there by default).
    if num_cores > 1 and is_v7x:
        core_par = getattr(pltpu, "CORE_PARALLEL", None)
        if core_par is not None:
            dims = (core_par, pltpu.ARBITRARY, pltpu.ARBITRARY)
        else:
            dims = ("parallel", "arbitrary", "arbitrary")
    else:
        dims = ("arbitrary", "arbitrary", "arbitrary")

    # Clamp the block index so overhanging/duplicate tiles stay in-bounds for the
    # DMA; their lanes are masked in-kernel via the true pixel count.
    def logits_map(core, ni, pi):
        t = jnp.minimum(core * tiles_per_core + pi, num_tiles - 1)
        return (ni, 0, t)

    def target_map(core, ni, pi):
        t = jnp.minimum(core * tiles_per_core + pi, num_tiles - 1)
        return (ni, 0, t)

    kernel = functools.partial(
        _ce2d_kernel,
        thr_t=float(thr_t),
        ignore_label=int(ignore_label),
        tiles_per_core=tiles_per_core,
        tile_p=tile_p,
        num_pix=p,
    )

    sum_parts, cnt_parts = pl.pallas_call(
        kernel,
        out_shape=(jax.ShapeDtypeStruct((num_cores, 1, tile_p), jnp.float32),
                   jax.ShapeDtypeStruct((num_cores, 1, tile_p), jnp.int32)),
        grid_spec=pltpu.PrefetchScalarGridSpec(
            num_scalar_prefetch=0,
            grid=grid,
            in_specs=[
                pl.BlockSpec((1, c, tile_p), logits_map),
                pl.BlockSpec((1, 1, tile_p), target_map),
            ],
            out_specs=[
                pl.BlockSpec((1, 1, tile_p), lambda core, ni, pi: (core, 0, 0)),
                pl.BlockSpec((1, 1, tile_p), lambda core, ni, pi: (core, 0, 0)),
            ],
            scratch_shapes=[
                pltpu.VMEM((1, tile_p), jnp.float32),   # running loss sum per lane
                pltpu.VMEM((1, tile_p), jnp.int32),     # running valid count per lane (exact)
            ],
        ),
        compiler_params=pltpu.CompilerParams(
            dimension_semantics=dims,
            vmem_limit_bytes=_vmem_limit_bytes(c, tile_p, itemsize, is_v7x),
        ),
    )(logits, tgt)

    loss_sum = jnp.sum(sum_parts)            # f32
    valid_cnt = jnp.sum(cnt_parts)           # exact int32 count of valid pixels
    # PyTorch returns zeros(1) when there are no valid targets.
    return jnp.where(valid_cnt > 0, loss_sum / valid_cnt.astype(jnp.float32),
                     jnp.float32(0.0))


def _reference_jax(predict, target, thr_t=1.0, ignore_label=255):
    """Pure-JAX reference mirroring the PyTorch forward."""
    n, c, h, w = predict.shape
    logits = jnp.transpose(predict, (0, 2, 3, 1)).reshape(-1, c).astype(jnp.float32)
    tgt = target.reshape(-1).astype(jnp.int32)
    valid = (tgt >= 0) & (tgt != ignore_label)
    logp = jax.nn.log_softmax(logits, axis=-1)
    ce = -jnp.take_along_axis(logp, jnp.where(valid, tgt, 0)[:, None], axis=-1)[:, 0]
    ce = ce * (ce <= thr_t).astype(jnp.float32)
    cnt = jnp.sum(valid.astype(jnp.float32))
    return jnp.where(cnt > 0, jnp.sum(jnp.where(valid, ce, 0.0)) / cnt, 0.0)


if __name__ == "__main__":
    # Case 1: canonical small shapes (single full tile).
    k1, k2, k3 = jax.random.split(jax.random.PRNGKey(0), 3)
    N, C, H, W = 2, 4, 16, 16
    predict = jax.random.normal(k1, (N, C, H, W), dtype=jnp.float32)
    target = jax.random.randint(k2, (N, H, W), 0, C, dtype=jnp.int32)
    ignore_mask = jax.random.uniform(k3, (N, H, W)) < 0.2
    target = jnp.where(ignore_mask, 255, target)

    loss = jax.block_until_ready(
        cross_entropy_2d_pnd(predict, target, thr_t=1.0, ignore_label=255))
    ref = jax.block_until_ready(
        _reference_jax(predict, target, thr_t=1.0, ignore_label=255))
    assert jnp.allclose(loss, ref, atol=1e-5, rtol=1e-5), (loss, ref)

    # Case 2: partial trailing tile (P % tile_p != 0), odd tile count, and a
    # forced 2-way core split (serial on 1-TC chips) to lock in the masking of
    # the clamped duplicate tile on the second "core".
    k4, k5, k6 = jax.random.split(jax.random.PRNGKey(1), 3)
    N2, C2, H2, W2 = 1, 4, 20, 15            # P = 300 -> 3 tiles of 128 lanes
    predict2 = jax.random.normal(k4, (N2, C2, H2, W2), dtype=jnp.float32)
    target2 = jax.random.randint(k5, (N2, H2, W2), 0, C2, dtype=jnp.int32)
    ignore2 = jax.random.uniform(k6, (N2, H2, W2)) < 0.3
    target2 = jnp.where(ignore2, 255, target2)

    loss2 = jax.block_until_ready(
        cross_entropy_2d_pnd(predict2, target2, thr_t=1.0, ignore_label=255,
                             num_cores=2, block_bytes=2048))
    ref2 = jax.block_until_ready(
        _reference_jax(predict2, target2, thr_t=1.0, ignore_label=255))
    assert jnp.allclose(loss2, ref2, atol=1e-5, rtol=1e-5), (loss2, ref2)

    print("KERNEL_OK")
</pallas_src>

<mosaic_0001>
module attributes {stable_mosaic.version = 11 : i64} {
  func.func @_ce2d_kernel(%arg0: i32, %arg1: i32, %arg2: i32, %arg3: memref<1x4x256xf32, #tpu.memory_space<vmem>>, %arg4: memref<1x1x256xi32, #tpu.memory_space<vmem>>, %arg5: memref<1x1x256xf32, #tpu.memory_space<vmem>>, %arg6: memref<1x1x256xi32, #tpu.memory_space<vmem>>, %arg7: memref<1x256xf32, #tpu.memory_space<vmem>>, %arg8: memref<1x256xi32, #tpu.memory_space<vmem>>) attributes {dimension_semantics = [#tpu.dimension_semantics<arbitrary>, #tpu.dimension_semantics<arbitrary>, #tpu.dimension_semantics<arbitrary>], iteration_bounds = array<i64: 1, 2, 1>, scalar_prefetch = 0 : i64, scratch_operands = 2 : i64, tpu.core_type = #tpu.core_type<tc>, window_params = [{transform_indices = @transform_0, window_bounds = array<i64: 1, 4, 256>}, {transform_indices = @transform_1, window_bounds = array<i64: 1, 1, 256>}, {transform_indices = @transform_2, window_bounds = array<i64: 1, 1, 256>}, {transform_indices = @transform_3, window_bounds = array<i64: 1, 1, 256>}]} {
    %c0_i32 = arith.constant 0 : i32
    %0 = arith.cmpi eq, %arg1, %c0_i32 : i32
    %c0_i32_0 = arith.constant 0 : i32
    %1 = arith.cmpi eq, %arg2, %c0_i32_0 : i32
    %2 = arith.andi %0, %1 : i1
    %c1_i32 = arith.constant 1 : i32
    %3 = arith.cmpi eq, %arg1, %c1_i32 : i32
    %c0_i32_1 = arith.constant 0 : i32
    %4 = arith.cmpi eq, %arg2, %c0_i32_1 : i32
    %5 = arith.andi %3, %4 : i1
    %6 = arith.extui %2 : i1 to i32
    %c0_i32_2 = arith.constant 0 : i32
    %7 = arith.cmpi ne, %6, %c0_i32_2 : i32
    scf.if %7 {
      %cst_26 = arith.constant 0.000000e+00 : f32
      %59 = vector.broadcast %cst_26 : f32 to vector<1x256xf32>
      %c0_27 = arith.constant 0 : index
      %c0_28 = arith.constant 0 : index
      %60 = vector.load %arg7[%c0_27, %c0_28] : memref<1x256xf32, #tpu.memory_space<vmem>>, vector<1x256xf32>
      tpu.vector_store %arg7[%c0_27, %c0_28], %59 {strides = array<i32>} : memref<1x256xf32, #tpu.memory_space<vmem>>, vector<1x256xf32>,
      %c0_i32_29 = arith.constant 0 : i32
      %61 = vector.broadcast %c0_i32_29 : i32 to vector<1x256xi32>
      %c0_30 = arith.constant 0 : index
      %c0_31 = arith.constant 0 : index
      %62 = vector.load %arg8[%c0_30, %c0_31] : memref<1x256xi32, #tpu.memory_space<vmem>>, vector<1x256xi32>
      tpu.vector_store %arg8[%c0_30, %c0_31], %61 {strides = array<i32>} : memref<1x256xi32, #tpu.memory_space<vmem>>, vector<1x256xi32>,
      %cst_32 = arith.constant 0.000000e+00 : f32
      %63 = vector.broadcast %cst_32 : f32 to vector<1x1x256xf32>
      %c0_33 = arith.constant 0 : index
      %c0_34 = arith.constant 0 : index
      %c0_35 = arith.constant 0 : index
      %64 = vector.load %arg5[%c0_33, %c0_34, %c0_35] : memref<1x1x256xf32, #tpu.memory_space<vmem>>, vector<1x1x256xf32>
      tpu.vector_store %arg5[%c0_33, %c0_34, %c0_35], %63 {strides = array<i32>} : memref<1x1x256xf32, #tpu.memory_space<vmem>>, vector<1x1x256xf32>,
      %c0_i32_36 = arith.constant 0 : i32
      %65 = vector.broadcast %c0_i32_36 : i32 to vector<1x1x256xi32>
      %c0_37 = arith.constant 0 : index
      %c0_38 = arith.constant 0 : index
      %c0_39 = arith.constant 0 : index
      %66 = vector.load %arg6[%c0_37, %c0_38, %c0_39] : memref<1x1x256xi32, #tpu.memory_space<vmem>>, vector<1x1x256xi32>
      tpu.vector_store %arg6[%c0_37, %c0_38, %c0_39], %65 {strides = array<i32>} : memref<1x1x256xi32, #tpu.memory_space<vmem>>, vector<1x1x256xi32>,
    } else {
    }
    %c0 = arith.constant 0 : index
    %c0_3 = arith.constant 0 : index
    %c0_4 = arith.constant 0 : index
    %8 = vector.load %arg3[%c0, %c0_3, %c0_4] : memref<1x4x256xf32, #tpu.memory_space<vmem>>, vector<1x4x256xf32>
    %9 = vector.shape_cast %8 : vector<1x4x256xf32> to vector<4x256xf32>
    %c0_5 = arith.constant 0 : index
    %c0_6 = arith.constant 0 : index
    %c0_7 = arith.constant 0 : index
    %10 = vector.load %arg4[%c0_5, %c0_6, %c0_7] : memref<1x1x256xi32, #tpu.memory_space<vmem>>, vector<1x1x256xi32>
    %11 = vector.shape_cast %10 : vector<1x1x256xi32> to vector<1x256xi32>
    %c1_i32_8 = arith.constant 1 : i32
    %12 = arith.muli %arg0, %c1_i32_8 : i32
    %13 = arith.addi %12, %arg2 : i32
    %14 = tpu.iota {dimensions = array<i32: 1>} : vector<1x256xi32>
    %c256_i32 = arith.constant 256 : i32
    %15 = arith.muli %13, %c256_i32 : i32
    %16 = vector.broadcast %15 : i32 to vector<1x256xi32>
    %17 = arith.addi %16, %14 : vector<1x256xi32>
    %c256_i32_9 = arith.constant 256 : i32
    %18 = vector.broadcast %c256_i32_9 : i32 to vector<1x256xi32>
    %19 = arith.cmpi slt, %17, %18 : vector<1x256xi32>
    %c0_i32_10 = arith.constant 0 : i32
    %20 = vector.broadcast %c0_i32_10 : i32 to vector<1x256xi32>
    %21 = arith.cmpi sge, %11, %20 : vector<1x256xi32>
    %c255_i32 = arith.constant 255 : i32
    %22 = vector.broadcast %c255_i32 : i32 to vector<1x256xi32>
    %23 = arith.cmpi ne, %11, %22 : vector<1x256xi32>
    %24 = arith.andi %21, %23 : vector<1x256xi1>
    %25 = arith.andi %24, %19 : vector<1x256xi1>
    %cst = arith.constant dense<0xFF800000> : vector<256xf32>
    %26 = vector.multi_reduction <maximumf>, %9, %cst [0] : vector<4x256xf32> to vector<256xf32>
    %27 = vector.shape_cast %26 : vector<256xf32> to vector<1x256xf32>
    %28 = vector.broadcast %27 : vector<1x256xf32> to vector<4x256xf32>
    %29 = arith.subf %9, %28 : vector<4x256xf32>
    %30 = tpu.iota {dimensions = array<i32: 0>} : vector<4x1xi32>
    %c0_i32_11 = arith.constant 0 : i32
    %31 = vector.broadcast %c0_i32_11 : i32 to vector<1x256xi32>
    %32 = arith.select %25, %11, %31 : vector<1x256xi1>, vector<1x256xi32>
    %33 = vector.broadcast %30 : vector<4x1xi32> to vector<4x256xi32>
    %34 = vector.broadcast %32 : vector<1x256xi32> to vector<4x256xi32>
    %35 = arith.cmpi eq, %33, %34 : vector<4x256xi32>
    %36 = math.exp %29 : vector<4x256xf32>
    %cst_12 = arith.constant dense<0.000000e+00> : vector<256xf32>
    %37 = vector.multi_reduction <add>, %36, %cst_12 [0] : vector<4x256xf32> to vector<256xf32>
    %38 = vector.shape_cast %37 : vector<256xf32> to vector<1x256xf32>
    %cst_13 = arith.constant 0.000000e+00 : f32
    %39 = vector.broadcast %cst_13 : f32 to vector<4x256xf32>
    %40 = arith.select %35, %29, %39 : vector<4x256xi1>, vector<4x256xf32>
    %cst_14 = arith.constant dense<0.000000e+00> : vector<256xf32>
    %41 = vector.multi_reduction <add>, %40, %cst_14 [0] : vector<4x256xf32> to vector<256xf32>
    %42 = vector.shape_cast %41 : vector<256xf32> to vector<1x256xf32>
    %43 = math.log %38 : vector<1x256xf32>
    %44 = arith.subf %43, %42 : vector<1x256xf32>
    %cst_15 = arith.constant 1.000000e+00 : f32
    %45 = vector.broadcast %cst_15 : f32 to vector<1x256xf32>
    %46 = arith.cmpf ole, %44, %45 : vector<1x256xf32>
    %47 = arith.andi %46, %25 : vector<1x256xi1>
    %c0_16 = arith.constant 0 : index
    %c0_17 = arith.constant 0 : index
    %48 = vector.load %arg7[%c0_16, %c0_17] : memref<1x256xf32, #tpu.memory_space<vmem>>, vector<1x256xf32>
    %cst_18 = arith.constant 0.000000e+00 : f32
    %49 = vector.broadcast %cst_18 : f32 to vector<1x256xf32>
    %50 = arith.select %47, %44, %49 : vector<1x256xi1>, vector<1x256xf32>
    %51 = arith.addf %48, %50 : vector<1x256xf32>
    %c0_19 = arith.constant 0 : index
    %c0_20 = arith.constant 0 : index
    %52 = vector.load %arg7[%c0_19, %c0_20] : memref<1x256xf32, #tpu.memory_space<vmem>>, vector<1x256xf32>
    tpu.vector_store %arg7[%c0_19, %c0_20], %51 {strides = array<i32>} : memref<1x256xf32, #tpu.memory_space<vmem>>, vector<1x256xf32>,
    %c0_21 = arith.constant 0 : index
    %c0_22 = arith.constant 0 : index
    %53 = vector.load %arg8[%c0_21, %c0_22] : memref<1x256xi32, #tpu.memory_space<vmem>>, vector<1x256xi32>
    %54 = arith.extui %25 : vector<1x256xi1> to vector<1x256xi32>
    %55 = arith.addi %53, %54 : vector<1x256xi32>
    %c0_23 = arith.constant 0 : index
    %c0_24 = arith.constant 0 : index
    %56 = vector.load %arg8[%c0_23, %c0_24] : memref<1x256xi32, #tpu.memory_space<vmem>>, vector<1x256xi32>
    tpu.vector_store %arg8[%c0_23, %c0_24], %55 {strides = array<i32>} : memref<1x256xi32, #tpu.memory_space<vmem>>, vector<1x256xi32>,
    %57 = arith.extui %5 : i1 to i32
    %c0_i32_25 = arith.constant 0 : i32
    %58 = arith.cmpi ne, %57, %c0_i32_25 : i32
    scf.if %58 {
      %c0_26 = arith.constant 0 : index
      %c0_27 = arith.constant 0 : index
      %59 = vector.load %arg7[%c0_26, %c0_27] : memref<1x256xf32, #tpu.memory_space<vmem>>, vector<1x256xf32>
      %60 = vector.shape_cast %59 : vector<1x256xf32> to vector<1x1x256xf32>
      %c0_28 = arith.constant 0 : index
      %c0_29 = arith.constant 0 : index
      %c0_30 = arith.constant 0 : index
      %61 = vector.load %arg5[%c0_28, %c0_29, %c0_30] : memref<1x1x256xf32, #tpu.memory_space<vmem>>, vector<1x1x256xf32>
      tpu.vector_store %arg5[%c0_28, %c0_29, %c0_30], %60 {strides = array<i32>} : memref<1x1x256xf32, #tpu.memory_space<vmem>>, vector<1x1x256xf32>,
      %c0_31 = arith.constant 0 : index
      %c0_32 = arith.constant 0 : index
      %62 = vector.load %arg8[%c0_31, %c0_32] : memref<1x256xi32, #tpu.memory_space<vmem>>, vector<1x256xi32>
      %63 = vector.shape_cast %62 : vector<1x256xi32> to vector<1x1x256xi32>
      %c0_33 = arith.constant 0 : index
      %c0_34 = arith.constant 0 : index
      %c0_35 = arith.constant 0 : index
      %64 = vector.load %arg6[%c0_33, %c0_34, %c0_35] : memref<1x1x256xi32, #tpu.memory_space<vmem>>, vector<1x1x256xi32>
      tpu.vector_store %arg6[%c0_33, %c0_34, %c0_35], %63 {strides = array<i32>} : memref<1x1x256xi32, #tpu.memory_space<vmem>>, vector<1x1x256xi32>,
    } else {
    }
    return
  }
  func.func @transform_0(%arg0: i32, %arg1: i32, %arg2: i32) -> (i32, i32, i32) {
    %c1_i32 = arith.constant 1 : i32
    %0 = arith.muli %arg0, %c1_i32 : i32
    %1 = arith.addi %0, %arg2 : i32
    %c0_i32 = arith.constant 0 : i32
    %2 = arith.minsi %1, %c0_i32 : i32
    %c0_i32_0 = arith.constant 0 : i32
    %c0_i32_1 = arith.constant 0 : i32
    return %arg1, %c0_i32_0, %2 : i32, i32, i32
  }
  func.func @transform_1(%arg0: i32, %arg1: i32, %arg2: i32) -> (i32, i32, i32) {
    %c1_i32 = arith.constant 1 : i32
    %0 = arith.muli %arg0, %c1_i32 : i32
    %1 = arith.addi %0, %arg2 : i32
    %c0_i32 = arith.constant 0 : i32
    %2 = arith.minsi %1, %c0_i32 : i32
    %c0_i32_0 = arith.constant 0 : i32
    %c0_i32_1 = arith.constant 0 : i32
    return %arg1, %c0_i32_0, %2 : i32, i32, i32
  }
  func.func @transform_2(%arg0: i32, %arg1: i32, %arg2: i32) -> (i32, i32, i32) {
    %c0_i32 = arith.constant 0 : i32
    %c0_i32_0 = arith.constant 0 : i32
    %c0_i32_1 = arith.constant 0 : i32
    return %arg0, %c0_i32, %c0_i32_0 : i32, i32, i32
  }
  func.func @transform_3(%arg0: i32, %arg1: i32, %arg2: i32) -> (i32, i32, i32) {
    %c0_i32 = arith.constant 0 : i32
    %c0_i32_0 = arith.constant 0 : i32
    %c0_i32_1 = arith.constant 0 : i32
    return %arg0, %c0_i32, %c0_i32_0 : i32, i32, i32
  }
}

</mosaic_0001>

<llo_original>
// kernel: tpu_custom_call.1
$region0: #{tpu_custom_call.1}
  #allocation0 [shape = 'u32[]', space=smem, size = 0x4, offset = 0x4, fixed_abs, tag = 'smem constant byte address 0x4 - core index']
  #allocation1 [shape = 'u32[144,128]{1,0:T(1,128)}', space=vmem, size = 0x12000, scoped, tag = 'internal scratch']
  #allocation2 [shape = 'f32[1,256]{1,0:T(1,128)}', space=vmem, size = 0x400, scoped, tag = 'scratch operand']
  #allocation3 [shape = 's32[1,256]{1,0:T(1,128)}', space=vmem, size = 0x400, scoped, tag = 'scratch operand']
  %s0 = inlined_call_operand.hbm [shape: f32[2,4,256], index: 0, kind: input, shape index: {}]
  %s1 = inlined_call_operand.hbm [shape: s32[2,1,256], index: 1, kind: input, shape index: {}]
  %s2 = inlined_call_operand.hbm [shape: f32[1,1,256], index: 2, kind: output, shape index: {0}]
  %s3 = inlined_call_operand.hbm [shape: s32[1,1,256], index: 3, kind: output, shape index: {1}]
  %4 = xla_tuple %s2, %s3
  %s5 = sld [smem:[#allocation0]]
  $region65: #{tpu_custom_call.1} parent=0
    _
  %s7 = ssub.s32 1, %s5
  %s8 = scalar_select 0, %s7, %s5
  $region1: #{tpu_custom_call.1} parent=0
    #allocation4 [shape = 'u8[8192]{0}', space=vmem, size = 0x2000, scoped, tag = 'input window, operand 0']
    #allocation5 [shape = 's32[2]{0}', space=sflag, size = 0x8, scoped, tag = 'scoped memory for tpu_custom_call.1']
    #allocation6 [shape = 's32[2]{0}', space=sflag, size = 0x8, scoped, tag = 'scoped memory for tpu_custom_call.1']
    #allocation7 [shape = 'u8[2048]{0}', space=vmem, size = 0x800, scoped, tag = 'input window, operand 1']
    #allocation8 [shape = 's32[2]{0}', space=sflag, size = 0x8, scoped, tag = 'scoped memory for tpu_custom_call.1']
    #allocation9 [shape = 'u8[1024]{0}', space=vmem, size = 0x400, scoped, tag = 'output window, operand 0, single buffered']
    #allocation10 [shape = 'u8[1024]{0}', space=vmem, size = 0x400, scoped, tag = 'output window, operand 1, single buffered']
    #allocation11 [shape = 's32[1]{0}', space=sflag, size = 0x4, scoped, tag = 'scoped memory for tpu_custom_call.1']
    %9 = vsyncpa [#allocation5], 0
    %s10 = scalar_lea.sflag [#allocation5], 1
    %11 = vsyncpa %s10, 0
    %12 = vsyncpa [#allocation8], 0
    %s13 = scalar_lea.sflag [#allocation8], 1
    %14 = vsyncpa %s13, 0
    %15 = vsyncpa [#allocation6], 0
    %16 = vsyncpa [#allocation11], 0
    loop: start=0, step=1, limit=4
    $region2: #{tpu_custom_call.1} parent=1 // loop_pre_header
      _
    $region3: #{tpu_custom_call.1} parent=1 // loop_header
      %s18 = sphi 0, %s22
      %p19 = scmp.ge.s32.totalorder %s18, 4
      %s25 = sphi 0, %s44
      %s26 = sphi 0, %s40
      %s27 = sphi 0, %s36
      %s28 = sphi 0, %s25
      %s29 = sphi 0, %s26
      %s30 = sphi 0, %s27
      %s31 = sphi 0, %s28
      %s32 = sphi 0, %s29
      %s33 = sphi 0, %s30
      %s55 = sphi 0, %s57
      %s58 = sphi 0, %s55
      %s59 = sphi 0, %s58
      %s75 = sphi 0, %s59
      %s89 = sphi 0, %s91
      %s92 = sphi 0, %s89
      %s93 = sphi 0, %s92
      %s109 = sphi 0, %s93
      %s115 = sphi 0, %s117
      %s118 = sphi 0, %s115
      %s119 = sphi 0, %s118
      %s135 = sphi 0, %s119
      %s141 = sphi 0, %s143
      %s144 = sphi 0, %s141
      %s145 = sphi 0, %s144
      %s161 = sphi 0, %s145
    $region4: #{tpu_custom_call.1} parent=1 // loop_header_branch
      %21 = sbr.rel (%p19) target = $region8
    $region5: #{tpu_custom_call.1} parent=1 // loop_body
      %s23 = ssub.s32 %s18, 1
      %s24 = ssub.s32 %s18, 2
      %s34 = sadd.s32 1, %s27
      %p35 = scmp.ge.s32.totalorder %s34, 1
      %s36 = scalar_select %p35, 0, %s34
      %s37 = sadd.s32 1, %s26
      %s38 = scalar_select %p35, %s37, %s26
      %p39 = scmp.ge.s32.totalorder %s38, 2
      %s40 = scalar_select %p39, 0, %s38
      %s41 = sadd.s32 1, %s25
      %s42 = scalar_select %p39, %s41, %s25
      %p43 = scmp.ge.s32.totalorder %s42, 1
      %s44 = scalar_select %p43, 0, %s42
      %s45 = sadd.s32 %s25, %s27
      %p46 = scmp.lt.s32.totalorder %s45, 0
      %s47 = scalar_select %p46, %s45, 0
      %s48 = sadd.s32 %s44, %s36
      %p49 = scmp.lt.s32.totalorder %s48, 0
      %s50 = scalar_select %p49, %s48, 0
      %s51 = ssub.s32 %s26, %s40
      %s52 = ssub.s32 %s47, %s50
      %s53 = sor.u32 %s51, %s52
      %p54 = scmp.eq.s32.totalorder %s53, 0
      %s56 = sadd.s32 %s55, 1
      %s57 = scalar_select %p54, %s55, %s56
      %p60 = pneg %p54
      %p61 = scmp.eq.s32.totalorder %s18, 1
      %p62 = por %p60, %p61
      %p63 = scmp.ne.s32.totalorder %s55, %s58
      %p64 = scmp.eq.s32.totalorder %s18, 0
      %p65 = por %p63, %p64
      %p66 = scmp.ne.s32.totalorder %s55, %s58
      %p67 = scmp.eq.s32.totalorder %s23, 1
      %p68 = por %p66, %p67
      %p69 = scmp.ne.s32.totalorder %s58, %s59
      %p70 = scmp.eq.s32.totalorder %s23, 0
      %p71 = por %p69, %p70
      %p72 = scmp.ne.s32.totalorder %s58, %s59
      %p73 = scmp.eq.s32.totalorder %s24, 1
      %p74 = por %p72, %p73
      %p76 = scmp.ne.s32.totalorder %s59, %s75
      %p77 = scmp.eq.s32.totalorder %s24, 0
      %p78 = por %p76, %p77
      %s79 = sadd.s32 %s25, %s27
      %p80 = scmp.lt.s32.totalorder %s79, 0
      %s81 = scalar_select %p80, %s79, 0
      %s82 = sadd.s32 %s44, %s36
      %p83 = scmp.lt.s32.totalorder %s82, 0
      %s84 = scalar_select %p83, %s82, 0
      %s85 = ssub.s32 %s26, %s40
      %s86 = ssub.s32 %s81, %s84
      %s87 = sor.u32 %s85, %s86
      %p88 = scmp.eq.s32.totalorder %s87, 0
      %s90 = sadd.s32 %s89, 1
      %s91 = scalar_select %p88, %s89, %s90
      %p94 = pneg %p88
      %p95 = scmp.eq.s32.totalorder %s18, 1
      %p96 = por %p94, %p95
      %p97 = scmp.ne.s32.totalorder %s89, %s92
      %p98 = scmp.eq.s32.totalorder %s18, 0
      %p99 = por %p97, %p98
      %p100 = scmp.ne.s32.totalorder %s89, %s92
      %p101 = scmp.eq.s32.totalorder %s23, 1
      %p102 = por %p100, %p101
      %p103 = scmp.ne.s32.totalorder %s92, %s93
      %p104 = scmp.eq.s32.totalorder %s23, 0
      %p105 = por %p103, %p104
      %p106 = scmp.ne.s32.totalorder %s92, %s93
      %p107 = scmp.eq.s32.totalorder %s24, 1
      %p108 = por %p106, %p107
      %p110 = scmp.ne.s32.totalorder %s93, %s109
      %p111 = scmp.eq.s32.totalorder %s24, 0
      %p112 = por %p110, %p111
      %s113 = ssub.s32 %s25, %s44
      %p114 = scmp.eq.s32.totalorder %s113, 0
      %s116 = sadd.s32 %s115, 1
      %s117 = scalar_select %p114, %s115, %s116
      %p120 = pneg %p114
      %p121 = scmp.eq.s32.totalorder %s18, 1
      %p122 = por %p120, %p121
      %p123 = scmp.ne.s32.totalorder %s115, %s118
      %p124 = scmp.eq.s32.totalorder %s18, 0
      %p125 = por %p123, %p124
      %p126 = scmp.ne.s32.totalorder %s115, %s118
      %p127 = scmp.eq.s32.totalorder %s23, 1
      %p128 = por %p126, %p127
      %p129 = scmp.ne.s32.totalorder %s118, %s119
      %p130 = scmp.eq.s32.totalorder %s23, 0
      %p131 = por %p129, %p130
      %p132 = scmp.ne.s32.totalorder %s118, %s119
      %p133 = scmp.eq.s32.totalorder %s24, 1
      %p134 = por %p132, %p133
      %p136 = scmp.ne.s32.totalorder %s119, %s135
      %p137 = scmp.eq.s32.totalorder %s24, 0
      %p138 = por %p136, %p137
      %s139 = ssub.s32 %s25, %s44
      %p140 = scmp.eq.s32.totalorder %s139, 0
      %s142 = sadd.s32 %s141, 1
      %s143 = scalar_select %p140, %s141, %s142
      %p146 = pneg %p140
      %p147 = scmp.eq.s32.totalorder %s18, 1
      %p148 = por %p146, %p147
      %p149 = scmp.ne.s32.totalorder %s141, %s144
      %p150 = scmp.eq.s32.totalorder %s18, 0
      %p151 = por %p149, %p150
      %p152 = scmp.ne.s32.totalorder %s141, %s144
      %p153 = scmp.eq.s32.totalorder %s23, 1
      %p154 = por %p152, %p153
      %p155 = scmp.ne.s32.totalorder %s144, %s145
      %p156 = scmp.eq.s32.totalorder %s23, 0
      %p157 = por %p155, %p156
      %p158 = scmp.ne.s32.totalorder %s144, %s145
      %p159 = scmp.eq.s32.totalorder %s24, 1
      %p160 = por %p158, %p159
      %p162 = scmp.ne.s32.totalorder %s145, %s161
      %p163 = scmp.eq.s32.totalorder %s24, 0
      %p164 = por %p162, %p163
      %p165 = scmp.le.s32.totalorder 1, %s18
      %p166 = scmp.lt.s32.totalorder %s18, 3
      %p167 = pnand %p165, %p166
      %p168 = pneg %p167
      // Predicated region
      $region9: #{tpu_custom_call.1} parent=5 // pred_check
        _
      $region10: #{tpu_custom_call.1} parent=5 // pred_check_branch
        %170 = sbr.rel (%p167) target = $region12
      $region11: #{tpu_custom_call.1} parent=5 // pred_region
        %s171 = ssub.s32 %s18, 1
      $region12: #{tpu_custom_call.1} parent=5 // pred_fallthru
        _
      %p172 = scmp.lt.s32.totalorder %s18, 2
      // Predicated region
      $region13: #{tpu_custom_call.1} parent=5 // pred_check
        %p173 = pneg %p172
      $region14: #{tpu_custom_call.1} parent=5 // pred_check_branch
        %175 = sbr.rel (%p173) target = $region16
      $region15: #{tpu_custom_call.1} parent=5 // pred_region
        // Predicated region
        $region17: #{tpu_custom_call.1} parent=15 // pred_check
          %p176 = pneg %p65
        $region18: #{tpu_custom_call.1} parent=15 // pred_check_branch
          %178 = sbr.rel (%p176) target = $region20
        $region19: #{tpu_custom_call.1} parent=15 // pred_region
          %s179 = sand.u32 %s55, 1
          %s180 = scalar_lea.sflag [#allocation5], %s179
          %s181 = sand.u32 %s55, 1
          %s182 = smul.addr %s181, 8
          %s183 = scalar_lea.vmem [#allocation4], %s182
          %s184 = sadd.s32 %s25, %s27
          %p185 = scmp.lt.s32.totalorder %s184, 0
          %s186 = scalar_select %p185, %s184, 0
          %s187 = smul.u32 2, %s186
          %s189 = ssub.s32 128, 128
          %190 = vsyncadd %s180, %s189
          %s191 = smul.addr %s26, 2
          %s192 = sadd.s32 %s187, %s191
          %s193 = smul.addr %s192, 64
          %s194 = scalar_lea.hbm %s0, %s193
          %s196 = sshll.u32 %s183, 4
          %s197 = int_to_ptr.vmem [resolvable:$true] %s196
          %199 = dma.hbm_to_vmem [thread:$0]  %s194, 128, %s197, %s180
        $region20: #{tpu_custom_call.1} parent=15 // pred_fallthru
          _
        // Predicated region
        $region21: #{tpu_custom_call.1} parent=15 // pred_check
          %p200 = pneg %p99
        $region22: #{tpu_custom_call.1} parent=15 // pred_check_branch
          %202 = sbr.rel (%p200) target = $region24
        $region23: #{tpu_custom_call.1} parent=15 // pred_region
          %s203 = sand.u32 %s89, 1
          %s204 = scalar_lea.sflag [#allocation8], %s203
          %s205 = sand.u32 %s89, 1
          %s206 = smul.addr %s205, 2
          %s207 = scalar_lea.vmem [#allocation7], %s206
          %s208 = sadd.s32 %s25, %s27
          %p209 = scmp.lt.s32.totalorder %s208, 0
          %s210 = scalar_select %p209, %s208, 0
          %s211 = smul.u32 2, %s210
          %s213 = ssub.s32 32, 32
          %214 = vsyncadd %s204, %s213
          %s215 = smul.addr %s26, 2
          %s216 = sadd.s32 %s211, %s215
          %s217 = smul.addr %s216, 16
          %s218 = scalar_lea.hbm %s1, %s217
          %s220 = sshll.u32 %s207, 4
          %s221 = int_to_ptr.vmem [resolvable:$true] %s220
          %223 = dma.hbm_to_vmem [thread:$0]  %s218, 32, %s221, %s204
        $region24: #{tpu_custom_call.1} parent=15 // pred_fallthru
          _
      $region16: #{tpu_custom_call.1} parent=5 // pred_fallthru
        _
      %p224 = scmp.le.s32.totalorder 1, %s18
      %p225 = scmp.lt.s32.totalorder %s18, 3
      %p226 = pnand %p224, %p225
      %p227 = pneg %p226
      // Predicated region
      $region25: #{tpu_custom_call.1} parent=5 // pred_check
        _
      $region26: #{tpu_custom_call.1} parent=5 // pred_check_branch
        %229 = sbr.rel (%p226) target = $region28
      $region27: #{tpu_custom_call.1} parent=5 // pred_region
        %s230 = ssub.s32 %s18, 1
        %s231 = sand.u32 %s58, 1
        %s232 = scalar_lea.sflag [#allocation5], %s231
        %s233 = sand.u32 %s58, 1
        %s234 = smul.addr %s233, 8
        %s235 = scalar_lea.vmem [#allocation4], %s234
        // Predicated region
        $region29: #{tpu_custom_call.1} parent=27 // pred_check
          %p236 = pneg %p71
        $region30: #{tpu_custom_call.1} parent=27 // pred_check_branch
          %238 = sbr.rel (%p236) target = $region32
        $region31: #{tpu_custom_call.1} parent=27 // pred_region
          %239 = dma.done %s232, 128
        $region32: #{tpu_custom_call.1} parent=27 // pred_fallthru
          _
        %s240 = sand.u32 %s92, 1
        %s241 = scalar_lea.sflag [#allocation8], %s240
        %s242 = sand.u32 %s92, 1
        %s243 = smul.addr %s242, 2
        %s244 = scalar_lea.vmem [#allocation7], %s243
        // Predicated region
        $region33: #{tpu_custom_call.1} parent=27 // pred_check
          %p245 = pneg %p105
        $region34: #{tpu_custom_call.1} parent=27 // pred_check_branch
          %247 = sbr.rel (%p245) target = $region36
        $region35: #{tpu_custom_call.1} parent=27 // pred_region
          %248 = dma.done %s241, 32
        $region36: #{tpu_custom_call.1} parent=27 // pred_fallthru
          _
        %s249 = sand.u32 %s58, 1
        %s250 = scalar_lea.sflag [#allocation5], %s249
        %s251 = sand.u32 %s58, 1
        %s252 = smul.addr %s251, 8
        %s253 = scalar_lea.vmem [#allocation4], %s252
        %p254 = pneg %p71
        %p255 = pneg %p68
        %s256 = sand.u32 %s92, 1
        %s257 = scalar_lea.sflag [#allocation8], %s256
        %s258 = sand.u32 %s92, 1
        %s259 = smul.addr %s258, 2
        %s260 = scalar_lea.vmem [#allocation7], %s259
        %p261 = pneg %p105
        %p262 = pneg %p102
        %p263 = pneg %p131
        %p264 = pneg %p128
        %p265 = pneg %p157
        %p266 = pneg %p154
        %s267 = sadd.s32 %s28, %s30
        %p268 = scmp.lt.s32.totalorder %s267, 0
        %s269 = scalar_select %p268, %s267, 0
        %s270 = smul.u32 2, %s269
        %s271 = sadd.s32 %s28, %s30
        %p272 = scmp.lt.s32.totalorder %s271, 0
        %s273 = scalar_select %p272, %s271, 0
        %s274 = smul.u32 2, %s273
        %p275 = scmp.eq.s32.totalorder %s29, 0
        %p276 = scmp.eq.s32.totalorder %s30, 0
        %p277 = pnand %p275, %p276
        %p278 = pneg %p277
        %p279 = scmp.eq.s32.totalorder %s29, 1
        %p280 = pnand %p279, %p276
        %p281 = pneg %p280
        // Predicated region
        $region37: #{tpu_custom_call.1} parent=27 // pred_check
          _
        $region38: #{tpu_custom_call.1} parent=27 // pred_check_branch
          %283 = sbr.rel (%p277) target = $region40
        $region39: #{tpu_custom_call.1} parent=27 // pred_region
          %v284 = vlaneseq
          %vm285 = vcmp.ge.s32.totalorder %v284, 0
          %vm286 = vcmp.lt.s32.totalorder %v284, 256
          %vm287 = vmand %vm285, %vm286
          %288 = vst.msk [vmem:[#allocation2] sm:$0x3] %vm287, 0.0
          %289 = vst.msk [vmem:[#allocation3] sm:$0x3] %vm287, 0
          %290 = vst.msk [vmem:[#allocation9] sm:$0x3] %vm287, 0.0
          %291 = vst.msk [vmem:[#allocation10] sm:$0x3] %vm287, 0
        $region40: #{tpu_custom_call.1} parent=27 // pred_fallthru
          _
        %v292 = vld [vmem:[%s235] sm:$0xff]
        %v293 = vld [vmem:[%s244] sm:$0x3]
        %s294 = sadd.s32 %s28, %s30
        %v295 = vlaneseq
        %v296 = vand.u32 %v295, 127
        %v297 = vadd.s32 %v296, 128
        %s298 = smul.u32 %s294, 256
        %v299 = vstv %s298
        %v300 = vadd.s32 %v299, %v296
        %v301 = vadd.s32 %v299, %v297
        %vm302 = vcmp.lt.s32.totalorder %v300, 256
        %vm303 = vcmp.lt.s32.totalorder %v301, 256
        %vm304 = vcmp.ge.s32.totalorder %v293, 0
        %vm305 = vcmp.ne.s32.totalorder %v293, 255
        %vm306 = vmand %vm304, %vm305
        %v307 = vsel %vm302, 1, 0
        %v308 = vsel %vm303, 1, 0
        %v309 = vcombine.low %v307, %v308
        %v311 = vunpack.c.l.s4 1966171168
        %v312 = vunpack.c.0.s8 %v311
        %v313 = vlaneseq
        %v314 = vshrl.u32 %v313, 7
        %v315 = vsub.s32 %v312, %v314
        %v316 = vrot.slane %v309, %v315
        %v318 = vunpack.c.l.s4 1966171168
        %v319 = vunpack.c.0.s8 %v318
        %v320 = vlaneseq
        %v321 = vshrl.u32 %v320, 7
        %v322 = vsub.s32 %v319, %v321
        %v323 = vrot.slane %v316, %v322
        %vm324 = vcmp.ne.s32.totalorder %v323, 0
        %vm325 = vmand %vm306, %vm324
        %v327 = vcombine.high %v292, %v292
        %vm329 = vcmask 1043456
        %v330 = vsel %vm329, %v292, -inf
        %v331 = vrot.slane %v330, 4
        %v332 = vmax.f32 %v330, %v331
        %v333 = vrot.slane %v332, 2
        %v334 = vmax.f32 %v332, %v333
        %v335 = vrot.slane %v334, 1
        %v336 = vmax.f32 %v334, %v335
        %v337 = vsel %vm329, %v327, -inf
        %v338 = vrot.slane %v337, 4
        %v339 = vmax.f32 %v337, %v338
        %v340 = vrot.slane %v339, 2
        %v341 = vmax.f32 %v339, %v340
        %v342 = vrot.slane %v341, 1
        %v343 = vmax.f32 %v341, %v342
        %v346 = vcombine.low %v336, %v343
        %v348 = vsub.f32 %v292, %v346
        %v349 = vlaneseq
        %v350 = vshrl.u32 %v349, 7
        %v351 = vsel %vm325, %v293, 0
        %v352 = vlaneseq
        %v353 = vshrl.u32 %v352, 7
        %v354 = vsub.s32 0, %v353
        %v355 = vrot.slane %v351, %v354
        %v356 = vlaneseq
        %v357 = vshrl.u32 %v356, 7
        %v358 = vsub.s32 1, %v357
        %v359 = vrot.slane %v351, %v358
        %vm360 = vcmp.eq.s32.totalorder %v350, %v355
        %vm361 = vcmp.eq.s32.totalorder %v350, %v359
        %v362 = vmul.f32 %v348, 1.442695
        %v363 = vpow.pop %v362
        %v365 = vcombine.high %v363, %v363
        %v367 = vsel %vm329, %v363, 0.0
        %v368 = vrot.slane %v367, 4
        %v369 = vadd.f32 %v367, %v368
        %v370 = vrot.slane %v369, 2
        %v371 = vadd.f32 %v369, %v370
        %v372 = vrot.slane %v371, 1
        %v373 = vadd.f32 %v371, %v372
        %v374 = vsel %vm329, %v365, 0.0
        %v375 = vrot.slane %v374, 4
        %v376 = vadd.f32 %v374, %v375
        %v377 = vrot.slane %v376, 2
        %v378 = vadd.f32 %v376, %v377
        %v379 = vrot.slane %v378, 1
        %v380 = vadd.f32 %v378, %v379
        %v382 = vcombine.high %v348, %v348
        %v384 = vsel %vm360, %v348, 0.0
        %v385 = vsel %vm361, %v382, 0.0
        %v386 = vsel %vm329, %v384, 0.0
        %v387 = vrot.slane %v386, 4
        %v388 = vadd.f32 %v386, %v387
        %v389 = vrot.slane %v388, 2
        %v390 = vadd.f32 %v388, %v389
        %v391 = vrot.slane %v390, 1
        %v392 = vadd.f32 %v390, %v391
        %v393 = vsel %vm329, %v385, 0.0
        %v394 = vrot.slane %v393, 4
        %v395 = vadd.f32 %v393, %v394
        %v396 = vrot.slane %v395, 2
        %v397 = vadd.f32 %v395, %v396
        %v398 = vrot.slane %v397, 1
        %v399 = vadd.f32 %v397, %v398
        %v400 = vlog2.pop %v373
        %v401 = vmul.f32 %v400, 0.6931472
        %v402 = vlog2.pop %v380
        %v403 = vmul.f32 %v402, 0.6931472
        %v404 = vsub.f32 %v401, %v392
        %v405 = vsub.f32 %v403, %v399
        %vm406 = vcmp.le.f32.partialorder %v404, 1.0
        %vm407 = vcmp.le.f32.partialorder %v405, 1.0
        %v408 = vsel %vm325, 1, 0
        %v409 = vlaneseq
        %v410 = vshrl.u32 %v409, 7
        %v411 = vsub.s32 0, %v410
        %v412 = vrot.slane %v408, %v411
        %v413 = vlaneseq
        %v414 = vshrl.u32 %v413, 7
        %v415 = vsub.s32 1, %v414
        %v416 = vrot.slane %v408, %v415
        %vm417 = vcmp.ne.s32.totalorder %v412, 0
        %vm418 = vcmp.ne.s32.totalorder %v416, 0
        %vm419 = vmand %vm406, %vm417
        %vm420 = vmand %vm407, %vm418
        %v421 = vld [vmem:[#allocation2] sm:$0x3]
        %v422 = vsel %vm419, %v404, 0.0
        %v423 = vsel %vm420, %v405, 0.0
        %v426 = vcombine.low %v422, %v423
        %v428 = vunpack.c.l.s4 1966171168
        %v429 = vunpack.c.0.s8 %v428
        %v430 = vlaneseq
        %v431 = vshrl.u32 %v430, 7
        %v432 = vsub.s32 %v429, %v431
        %v433 = vrot.slane %v426, %v432
        %v435 = vunpack.c.l.s4 1966171168
        %v436 = vunpack.c.0.s8 %v435
        %v437 = vlaneseq
        %v438 = vshrl.u32 %v437, 7
        %v439 = vsub.s32 %v436, %v438
        %v440 = vrot.slane %v433, %v439
        %v442 = vadd.f32 %v421, %v440
        %v443 = vlaneseq
        %vm444 = vcmp.ge.s32.totalorder %v443, 0
        %vm445 = vcmp.lt.s32.totalorder %v443, 256
        %vm446 = vmand %vm444, %vm445
        %447 = vst.msk [vmem:[#allocation2] sm:$0x3] %vm446, %v442
        %v448 = vld [vmem:[#allocation3] sm:$0x3]
        %v449 = vadd.s32 %v448, %v408
        %450 = vst.msk [vmem:[#allocation3] sm:$0x3] %vm446, %v449
        // Predicated region
        $region41: #{tpu_custom_call.1} parent=27 // pred_check
          _
        $region42: #{tpu_custom_call.1} parent=27 // pred_check_branch
          %452 = sbr.rel (%p280) target = $region44
        $region43: #{tpu_custom_call.1} parent=27 // pred_region
          %v453 = vld [vmem:[#allocation2] sm:$0x3]
          %454 = vst.msk [vmem:[#allocation9] sm:$0x3] %vm446, %v453
          %v455 = vld [vmem:[#allocation3] sm:$0x3]
          %456 = vst.msk [vmem:[#allocation10] sm:$0x3] %vm446, %v455
        $region44: #{tpu_custom_call.1} parent=27 // pred_fallthru
          _
        // Predicated region
        $region45: #{tpu_custom_call.1} parent=27 // pred_check
          %p457 = pneg %p128
        $region46: #{tpu_custom_call.1} parent=27 // pred_check_branch
          %459 = sbr.rel (%p457) target = $region48
        $region47: #{tpu_custom_call.1} parent=27 // pred_region
          %s461 = ssub.s32 32, 32
          %462 = vsyncadd [#allocation6], %s461
          %s463 = smul.addr %s28, 2
          %s464 = smul.addr %s463, 16
          %s465 = scalar_lea.hbm %s2, %s464
          %s467 = sshll.u32 [#allocation9], 4
          %s468 = int_to_ptr.vmem [resolvable:$true] %s467
          %470 = dma.vmem_to_hbm [thread:$0]  %s468, 32, %s465, [#allocation6]
        $region48: #{tpu_custom_call.1} parent=27 // pred_fallthru
          _
        // Predicated region
        $region49: #{tpu_custom_call.1} parent=27 // pred_check
          %p471 = pneg %p154
        $region50: #{tpu_custom_call.1} parent=27 // pred_check_branch
          %473 = sbr.rel (%p471) target = $region52
        $region51: #{tpu_custom_call.1} parent=27 // pred_region
          %s475 = ssub.s32 32, 32
          %476 = vsyncadd [#allocation11], %s475
          %s477 = smul.addr %s28, 2
          %s478 = smul.addr %s477, 16
          %s479 = scalar_lea.hbm %s3, %s478
          %s481 = sshll.u32 [#allocation10], 4
          %s482 = int_to_ptr.vmem [resolvable:$true] %s481
          %484 = dma.vmem_to_hbm [thread:$0]  %s482, 32, %s479, [#allocation11]
        $region52: #{tpu_custom_call.1} parent=27 // pred_fallthru
          _
        // Predicated region
        $region53: #{tpu_custom_call.1} parent=27 // pred_check
          %p485 = pneg %p128
        $region54: #{tpu_custom_call.1} parent=27 // pred_check_branch
          %487 = sbr.rel (%p485) target = $region56
        $region55: #{tpu_custom_call.1} parent=27 // pred_region
          %488 = dma.done [#allocation6], 32
        $region56: #{tpu_custom_call.1} parent=27 // pred_fallthru
          _
        // Predicated region
        $region57: #{tpu_custom_call.1} parent=27 // pred_check
          %p489 = pneg %p154
        $region58: #{tpu_custom_call.1} parent=27 // pred_check_branch
          %491 = sbr.rel (%p489) target = $region60
        $region59: #{tpu_custom_call.1} parent=27 // pred_region
          %492 = dma.done [#allocation11], 32
        $region60: #{tpu_custom_call.1} parent=27 // pred_fallthru
          _
      $region28: #{tpu_custom_call.1} parent=5 // pred_fallthru
        _
      %p493 = scmp.le.s32.totalorder 2, %s18
      // Predicated region
      $region61: #{tpu_custom_call.1} parent=5 // pred_check
        %p494 = pneg %p493
      $region62: #{tpu_custom_call.1} parent=5 // pred_check_branch
        %496 = sbr.rel (%p494) target = $region64
      $region63: #{tpu_custom_call.1} parent=5 // pred_region
        %s497 = ssub.s32 %s18, 2
      $region64: #{tpu_custom_call.1} parent=5 // pred_fallthru
        _
    $region6: #{tpu_custom_call.1} parent=1 // loop_footer
      %s22 = sadd.s32 1, %s18
    $region7: #{tpu_custom_call.1} parent=1 // loop_footer_branch
      %17 = sbr.rel target = $region3
    $region8: #{tpu_custom_call.1} parent=1 // loop_exit
      _
    %498 = vsyncpa [#allocation5], 1
    %s499 = scalar_lea.sflag [#allocation5], 1
    %500 = vsyncpa %s499, 1
    %501 = vsyncpa [#allocation8], 1
    %s502 = scalar_lea.sflag [#allocation8], 1
    %503 = vsyncpa %s502, 1
    %504 = vsyncpa [#allocation6], 1
    %s505 = scalar_lea.sflag [#allocation6], 1
    %506 = vsyncpa %s505, 1
    %507 = vsyncpa [#allocation11], 1

</llo_original>
